<compile_context>
chip_gen: v7x
topology: tpu7x:2x2x1
jax: 0.10.0
libtpu: 0.0.40
codegen_flags: <defaults>
</compile_context>

<pallas_src>
import math
import functools

import jax
import jax.numpy as jnp
from jax import lax
from jax.experimental import pallas as pl
from jax.experimental.pallas import tpu as pltpu


def _vmem_budget(working_bytes, floor=16 << 20, cap=48 << 20, headroom=4 << 20):
    """Per-kernel VMEM request: actual need + headroom, never the full v7x VMEM."""
    return int(min(cap, max(floor, working_bytes + headroom)))


def _project_kernel(x_ref, w_ref, e_ref, et_ref, *, normalize_inputs,
                    use_projector):
    f32 = jnp.float32
    x = x_ref[...].astype(f32)                            # (TM, C_in)
    if normalize_inputs:                                  # F.normalize(inputs)
        nrm = jnp.sqrt(jnp.sum(x * x, axis=1, keepdims=True))
        x = x / jnp.maximum(nrm, 1e-12)
    if use_projector:
        # Weight is already F.normalize()'d and bf16-cast in the wrapper
        # (hoisted out of the per-tile loop).  bf16 operands, f32 accumulation.
        e = lax.dot_general(x.astype(jnp.bfloat16), w_ref[...],
                            (((1,), (1,)), ((), ())),
                            preferred_element_type=f32)   # (TM, C_embed)
        e_bf = e.astype(jnp.bfloat16)
    else:
        e_bf = x.astype(jnp.bfloat16)
    e_ref[...] = e_bf
    et_ref[...] = e_bf.T                                  # transpose once here


def _supcon_tile_kernel(tcol_ref, trow_ref, e_ref, et_ref, out_ref, *scratch,
                        scale, margin, easy_margin, compute_diagnostics,
                        idx_bits):
    f32 = jnp.float32
    if compute_diagnostics:
        (m_scr, se_scr, num_scr, npp_scr,
         dp_scr, dn_scr, k1_scr, k2_scr) = scratch
    else:
        m_scr, se_scr, num_scr, npp_scr = scratch

    tile_m = e_ref.shape[0]
    tile_n = et_ref.shape[1]
    i = pl.program_id(0)
    j = pl.program_id(1)
    row0 = i * tile_m
    col0 = j * tile_n
    IMAX = jnp.int32(0x7FFFFFFF)

    @pl.when(j == 0)
    def _init():
        m_scr[...] = jnp.zeros_like(m_scr)        # running max, clamped at 0
        se_scr[...] = jnp.zeros_like(se_scr)
        num_scr[...] = jnp.zeros_like(num_scr)
        npp_scr[...] = jnp.zeros_like(npp_scr)
        if compute_diagnostics:
            dp_scr[...] = jnp.zeros_like(dp_scr)
            dn_scr[...] = jnp.full_like(dn_scr, jnp.inf)
            k1_scr[...] = jnp.full_like(k1_scr, IMAX)
            k2_scr[...] = jnp.full_like(k2_scr, IMAX)

    er = e_ref[...]                               # (TM, C)  bf16
    ec = et_ref[...]                              # (C, TN)  bf16
    tcol = tcol_ref[...]                          # (TM, 1)  int32
    trow = trow_ref[...]                          # (1, TN)  int32

    # (TM, TN) similarity slab on the MXU: bf16 operands, f32 accumulation.
    cos = jnp.dot(er, ec, preferred_element_type=f32)

    pos_i = tcol > 0                              # (TM, 1) anchor is an object
    pos_j = trow > 0                              # (1, TN) column is an object
    pair = jnp.logical_and(pos_i, pos_j)          # (TM, TN)
    same = tcol == trow                           # (TM, TN)
    row_ids = row0 + lax.broadcasted_iota(jnp.int32, (tile_m, 1), 0)
    col_ids = col0 + lax.broadcasted_iota(jnp.int32, (1, tile_n), 1)
    not_diag = row_ids != col_ids                 # (TM, TN) via cheap broadcast
    mask_pos = pair & same & not_diag
    mask_rest = pair & not_diag
    mask_pos_f = mask_pos.astype(f32)             # reused: loss_num, npp, dist_p

    # torch clamps unconditionally in pair_similarity -> keep the clip even when
    # margin is None (parity; embeddings are not unit-norm in general).
    cos_cl = jnp.clip(cos, -0.99999, 0.99999)
    if margin is not None:                        # ArcFace-style margin
        cos_m = math.cos(margin)
        sin_m = math.sin(margin)
        th = math.cos(math.pi - margin)
        mm = math.sin(math.pi - margin) * margin
        sine = jnp.sqrt(1.0 - cos_cl * cos_cl)
        cos_phi = cos_cl * cos_m - sine * sin_m
        if easy_margin:
            cos_phi = jnp.where(cos_cl > 0, cos_phi, cos_cl)
        else:
            cos_phi = jnp.where(cos_cl > th, cos_phi, cos_cl - mm)
        cos_cl = jnp.where(mask_pos, cos_phi, cos_cl)
    z = scale * cos_cl

    # ---- online masked logsumexp + positive-pair running sums ----
    zm = jnp.where(mask_rest, z, -jnp.inf)        # reused for both max and exp
    m_old = m_scr[...]
    m_new = jnp.maximum(m_old, jnp.max(zm, axis=1, keepdims=True))   # >= 0
    alpha = jnp.exp(m_old - m_new)
    se_scr[...] = alpha * se_scr[...] + jnp.sum(jnp.exp(zm - m_new),
                                                axis=1, keepdims=True)
    m_scr[...] = m_new
    num_scr[...] = num_scr[...] + jnp.sum(z * mask_pos_f, axis=1, keepdims=True)
    npp_scr[...] = npp_scr[...] + jnp.sum(mask_pos_f, axis=1, keepdims=True)

    if compute_diagnostics:
        mask_neg = pair & jnp.logical_not(same)
        dist = 1.0 - cos                          # unclamped / unscaled (torch)
        dp_scr[...] = jnp.maximum(
            dp_scr[...], jnp.max(dist * mask_pos_f, axis=1, keepdims=True))
        dn_scr[...] = jnp.minimum(
            dn_scr[...],
            jnp.min(jnp.where(mask_neg, dist, jnp.inf), axis=1, keepdims=True))

        # Running top-2 smallest dist over object columns via fused sortable
        # int32 keys: high bits = order-preserving view of dist (sign-handled),
        # low bits = (global column index << 1) | is_positive_pair.  Each rank
        # then costs a single lane-min per column tile (unique keys -> exact
        # duplicate handling; value quantized by 2**idx_bits ULPs, diag only).
        vb = pltpu.bitcast(dist, jnp.int32)
        sort_v = vb ^ (jnp.right_shift(vb, 31) & jnp.int32(0x7FFFFFFF))
        hi_mask = jnp.int32(~((1 << idx_bits) - 1))
        tag = col_ids * 2 + mask_pos.astype(jnp.int32)
        key = jnp.where(pos_j, (sort_v & hi_mask) | tag, IMAX)
        b1 = jnp.min(key, axis=1, keepdims=True)
        b2 = jnp.min(jnp.where(key == b1, IMAX, key), axis=1, keepdims=True)
        a1 = k1_scr[...]
        a2 = k2_scr[...]
        k1_scr[...] = jnp.minimum(a1, b1)
        k2_scr[...] = jnp.minimum(jnp.maximum(a1, b1), jnp.minimum(a2, b2))

    @pl.when(j == pl.num_programs(1) - 1)
    def _finalize():
        zero = jnp.zeros((), f32)
        m = m_scr[...]
        # exact: log(sum(exp(z)*mask_rest) + 1e-6) == m + log(se + 1e-6*exp(-m))
        loss_den = m + jnp.log(se_scr[...] + 1e-6 * jnp.exp(-m))
        npp = npp_scr[...]
        valid = npp > 0
        per_anchor = -num_scr[...] / jnp.maximum(npp, 1.0) + loss_den
        p_loss = jnp.sum(jnp.where(valid, per_anchor, zero))
        p_nvalid = jnp.sum(valid.astype(f32))
        p_npos = jnp.sum(pos_i.astype(f32))
        if compute_diagnostics:
            p_dp = jnp.sum(jnp.where(pos_i, dp_scr[...], zero))
            p_dn = jnp.sum(jnp.where(pos_i, dn_scr[...], zero))
            p_acc = jnp.sum(jnp.where(pos_i,
                                      (dn_scr[...] > dp_scr[...]).astype(f32),
                                      zero))
            top1_same = (k2_scr[...] & 1).astype(f32)
            p_prec = jnp.sum(jnp.where(pos_i, top1_same, zero))
        else:
            p_dp = p_dn = p_acc = p_prec = zero
        # Pack the 8 per-tile partials into a (8,128)-aligned lane-replicated
        # block; written once per row tile (last column step) so cost is tiny.
        sub = lax.broadcasted_iota(jnp.int32, (1, 8, 128), 1)
        out_ref[...] = (jnp.where(sub == 0, p_loss, 0.0)
                        + jnp.where(sub == 1, p_nvalid, 0.0)
                        + jnp.where(sub == 2, p_npos, 0.0)
                        + jnp.where(sub == 3, p_dp, 0.0)
                        + jnp.where(sub == 4, p_dn, 0.0)
                        + jnp.where(sub == 5, p_acc, 0.0)
                        + jnp.where(sub == 6, p_prec, 0.0))


def sup_contrast_loss(inputs, targets, weight_param=None, *, scale=16.0,
                      margin=None, easy_margin=True, ignore_class0=True,
                      normalize_inputs=False, loss_weight=1.0,
                      compute_diagnostics=False, block_m=128, block_n=256):
    """Forward pass of mmdet SupContrastLoss.

    block_m: anchor-row tile (keep 128 on v7x; 256 worth sweeping on v5e/v6e).
    block_n: similarity-column tile (multiple of 256 keeps the 256-wide MXU of
             v6e/v7x full; 128 is enough on v5e).
    """
    # TODO(synk): ignore_class0=False branch (objects-vs-background block),
    # reduction!='mean' / avg_factor / per-sample weight, and a custom_vjp
    # backward are not implemented (forward only).
    assert ignore_class0, "only ignore_class0=True is implemented"
    assert margin is None or margin > 0, "Margin must be None or Positive"
    assert block_m % 128 == 0 and block_n % 128 == 0

    n, c_in = inputs.shape
    use_projector = weight_param is not None
    c_embed = weight_param.shape[0] if use_projector else c_in
    bf16 = jnp.bfloat16

    # Pad N to a common multiple of the row/column tiles.  Padded rows/cols get
    # label 0 (background) so they never contribute.  For small n this also
    # yields >= 2 row tiles -> both v7x TensorCores stay busy on the row axis.
    lcm = block_m * block_n // math.gcd(block_m, block_n)
    n_pad = ((n + lcm - 1) // lcm) * lcm
    num_row_tiles = n_pad // block_m
    num_col_tiles = n_pad // block_n

    x_p = jnp.zeros((n_pad, c_in), inputs.dtype).at[:n].set(inputs)
    t_p = jnp.zeros((n_pad,), jnp.int32).at[:n].set(targets.astype(jnp.int32))
    tcol = t_p.reshape(n_pad, 1)
    trow = t_p.reshape(1, n_pad)

    # ---- projection: F.normalize(weight) hoisted out of the kernel ----
    if use_projector:
        w32 = weight_param.astype(jnp.float32)
        w32 = w32 / jnp.maximum(
            jnp.sqrt(jnp.sum(w32 * w32, axis=1, keepdims=True)), 1e-12)
        w_bf = w32.astype(bf16)
    else:
        w_bf = jnp.zeros((1, c_in), bf16)          # dummy, statically ignored

    if use_projector or normalize_inputs:
        vmem1 = _vmem_budget(
            2 * block_m * c_in * x_p.dtype.itemsize      # x tile (double-buf)
            + 2 * w_bf.size * 2                          # weight (resident)
            + 4 * block_m * c_embed * 2                  # e + e.T tiles (x2 buf)
            + 4 * block_m * max(c_in, c_embed) * 4)      # f32 temporaries
        embed, embed_t = pl.pallas_call(
            functools.partial(_project_kernel,
                              normalize_inputs=normalize_inputs,
                              use_projector=use_projector),
            out_shape=(jax.ShapeDtypeStruct((n_pad, c_embed), bf16),
                       jax.ShapeDtypeStruct((c_embed, n_pad), bf16)),
            grid_spec=pltpu.PrefetchScalarGridSpec(
                num_scalar_prefetch=0, grid=(num_row_tiles,),
                in_specs=[pl.BlockSpec((block_m, c_in), lambda i: (i, 0)),
                          pl.BlockSpec((w_bf.shape[0], c_in), lambda i: (0, 0))],
                out_specs=[pl.BlockSpec((block_m, c_embed), lambda i: (i, 0)),
                           pl.BlockSpec((c_embed, block_m), lambda i: (0, i))]),
            compiler_params=pltpu.CompilerParams(
                dimension_semantics=("parallel",), vmem_limit_bytes=vmem1),
            cost_estimate=pl.CostEstimate(
                flops=(2 * n_pad * c_in * c_embed) if use_projector else 0,
                transcendentals=0,
                bytes_accessed=n_pad * c_in * x_p.dtype.itemsize
                               + w_bf.size * 2 + 2 * n_pad * c_embed * 2),
        )(x_p, w_bf)
    else:
        # Identity projection: just a bf16 cast + one XLA transpose, no kernel.
        embed = x_p.astype(bf16)
        embed_t = embed.T

    # ---- kernel 2: streamed loss (+ optional diagnostics) ----
    idx_bits = max(1, (n_pad - 1).bit_length()) + 1   # column index + flag bit
    scratch_shapes = [pltpu.VMEM((block_m, 1), jnp.float32) for _ in range(4)]
    if compute_diagnostics:
        scratch_shapes += [pltpu.VMEM((block_m, 1), jnp.float32)
                           for _ in range(2)]
        scratch_shapes += [pltpu.VMEM((block_m, 1), jnp.int32)
                           for _ in range(2)]

    vmem2 = _vmem_budget(
        2 * (block_m * c_embed * 2 + c_embed * block_n * 2    # e / e.T tiles
             + block_m * 4 + block_n * 4)                     # label tiles
        + len(scratch_shapes) * block_m * 128 * 4             # scratch (padded)
        + 2 * 8 * 128 * 4                                     # partials block
        + 12 * block_m * block_n * 4)                         # (TM,TN) temps

    partials = pl.pallas_call(
        functools.partial(_supcon_tile_kernel, scale=float(scale), margin=margin,
                          easy_margin=easy_margin,
                          compute_diagnostics=compute_diagnostics,
                          idx_bits=idx_bits),
        out_shape=jax.ShapeDtypeStruct((num_row_tiles, 8, 128), jnp.float32),
        grid_spec=pltpu.PrefetchScalarGridSpec(
            num_scalar_prefetch=0, grid=(num_row_tiles, num_col_tiles),
            in_specs=[pl.BlockSpec((block_m, 1), lambda i, j: (i, 0)),
                      pl.BlockSpec((1, block_n), lambda i, j: (0, j)),
                      pl.BlockSpec((block_m, c_embed), lambda i, j: (i, 0)),
                      pl.BlockSpec((c_embed, block_n), lambda i, j: (0, j))],
            out_specs=pl.BlockSpec((1, 8, 128), lambda i, j: (i, 0, 0)),
            scratch_shapes=scratch_shapes),
        compiler_params=pltpu.CompilerParams(
            dimension_semantics=("parallel", "arbitrary"),
            vmem_limit_bytes=vmem2),
        cost_estimate=pl.CostEstimate(
            flops=2 * n_pad * n_pad * c_embed,
            transcendentals=n_pad * n_pad,
            bytes_accessed=n_pad * c_embed * 2
                           + num_row_tiles * n_pad * c_embed * 2
                           + (num_row_tiles + 1) * n_pad * 4
                           + num_row_tiles * 8 * 128 * 4),
    )(tcol, trow, embed, embed_t)

    tot = jnp.sum(partials[:, :, 0], axis=0)                  # (8,)
    loss_sum, n_valid, n_pos = tot[0], tot[1], tot[2]
    # mean over valid anchors; no valid anchors -> 0 (mirrors the torch guard).
    loss = jnp.where(n_valid > 0, loss_sum / jnp.maximum(n_valid, 1.0), 0.0)
    out = dict(loss_contrastive=loss_weight * loss)
    if compute_diagnostics:
        inv_npos = 1.0 / jnp.maximum(n_pos, 1.0)
        out.update(pw_dist_p=tot[3] * inv_npos, pw_dist_n=tot[4] * inv_npos,
                   pw_acc=tot[5] * inv_npos, pw_prec=tot[6] * inv_npos)
    return out


if __name__ == "__main__":
    key = jax.random.PRNGKey(0)
    n, c_in, c_embed = 16, 32, 128
    k1, k2 = jax.random.split(key)

    inputs = jax.random.normal(k1, (n, c_in), jnp.float32)
    # class 0 = background (ignored anchors); classes > 0 = objects, with >= 2
    # samples per positive class so every positive anchor is a valid anchor.
    targets = jnp.array([0, 1, 1, 2, 2, 2, 3, 3, 0, 1, 2, 3, 1, 2, 3, 0],
                        dtype=jnp.int32)

    # Deterministic xavier_uniform-style init of the (embed, in) projector.
    bound = math.sqrt(6.0 / (c_in + c_embed))
    weight = jax.random.uniform(k2, (c_embed, c_in), jnp.float32, -bound, bound)

    # Full metrics path (projector + torch.no_grad() diagnostics).
    out = sup_contrast_loss(inputs, targets, weight, scale=16.0, margin=None,
                            easy_margin=True, ignore_class0=True,
                            normalize_inputs=False, loss_weight=1.0,
                            compute_diagnostics=True)
    out = {k: jax.block_until_ready(v) for k, v in out.items()}
    for k, v in out.items():
        assert bool(jnp.isfinite(v)), (k, v)

    # Training hot path: diagnostics compiled out (new default).
    fast = sup_contrast_loss(inputs, targets, weight)
    assert bool(jnp.isfinite(jax.block_until_ready(fast["loss_contrastive"])))

    # Identity projection (no projector, no input-normalize) + ArcFace margin:
    # exercises the kernel-1-skip branch and the margin branch of kernel 2.
    ident = sup_contrast_loss(inputs, targets, None, margin=0.3)
    assert bool(jnp.isfinite(jax.block_until_ready(ident["loss_contrastive"])))

    print("KERNEL_OK")
</pallas_src>

<mosaic_0001>
module attributes {stable_mosaic.version = 11 : i64} {
  func.func @_project_kernel(%arg0: i32, %arg1: memref<128x32xf32, #tpu.memory_space<vmem>>, %arg2: memref<128x32xbf16, #tpu.memory_space<vmem>>, %arg3: memref<128x128xbf16, #tpu.memory_space<vmem>>, %arg4: memref<128x128xbf16, #tpu.memory_space<vmem>>) attributes {dimension_semantics = [#tpu.dimension_semantics<parallel>], iteration_bounds = array<i64: 2>, scalar_prefetch = 0 : i64, scratch_operands = 0 : i64, tpu.core_type = #tpu.core_type<tc>, window_params = [{transform_indices = @transform_0, window_bounds = array<i64: 128, 32>}, {pipeline_mode = #tpu.pipeline_mode<synchronous>, transform_indices = @transform_1, window_bounds = array<i64: 128, 32>}, {transform_indices = @transform_2, window_bounds = array<i64: 128, 128>}, {transform_indices = @transform_3, window_bounds = array<i64: 128, 128>}]} {
    %c0 = arith.constant 0 : index
    %c0_0 = arith.constant 0 : index
    %0 = vector.load %arg1[%c0, %c0_0] : memref<128x32xf32, #tpu.memory_space<vmem>>, vector<128x32xf32>
    %1 = arith.truncf %0 : vector<128x32xf32> to vector<128x32xbf16>
    %c0_1 = arith.constant 0 : index
    %c0_2 = arith.constant 0 : index
    %2 = vector.load %arg2[%c0_1, %c0_2] : memref<128x32xbf16, #tpu.memory_space<vmem>>, vector<128x32xbf16>
    %cst = arith.constant dense<0.000000e+00> : vector<128x128xf32>
    %3 = tpu.matmul %1, %2, %cst {dimension_numbers = #tpu.dot_dimension_numbers<[1], [1], [0], [0], [0, 0, 1, 0], [], []>} : vector<128x32xbf16>, vector<128x32xbf16>, vector<128x128xf32> -> vector<128x128xf32>
    %4 = arith.truncf %3 : vector<128x128xf32> to vector<128x128xbf16>
    %c0_3 = arith.constant 0 : index
    %c0_4 = arith.constant 0 : index
    %5 = vector.load %arg3[%c0_3, %c0_4] : memref<128x128xbf16, #tpu.memory_space<vmem>>, vector<128x128xbf16>
    tpu.vector_store %arg3[%c0_3, %c0_4], %4 {strides = array<i32>} : memref<128x128xbf16, #tpu.memory_space<vmem>>, vector<128x128xbf16>,
    %6 = tpu.transpose %4, [1, 0] : vector<128x128xbf16> -> vector<128x128xbf16>
    %c0_5 = arith.constant 0 : index
    %c0_6 = arith.constant 0 : index
    %7 = vector.load %arg4[%c0_5, %c0_6] : memref<128x128xbf16, #tpu.memory_space<vmem>>, vector<128x128xbf16>
    tpu.vector_store %arg4[%c0_5, %c0_6], %6 {strides = array<i32>} : memref<128x128xbf16, #tpu.memory_space<vmem>>, vector<128x128xbf16>,
    return
  }
  func.func @transform_0(%arg0: i32) -> (i32, i32) {
    %c0_i32 = arith.constant 0 : i32
    %c0_i32_0 = arith.constant 0 : i32
    return %arg0, %c0_i32 : i32, i32
  }
  func.func @transform_1(%arg0: i32) -> (i32, i32) {
    %c0_i32 = arith.constant 0 : i32
    %c0_i32_0 = arith.constant 0 : i32
    %c0_i32_1 = arith.constant 0 : i32
    return %c0_i32, %c0_i32_0 : i32, i32
  }
  func.func @transform_2(%arg0: i32) -> (i32, i32) {
    %c0_i32 = arith.constant 0 : i32
    %c0_i32_0 = arith.constant 0 : i32
    return %arg0, %c0_i32 : i32, i32
  }
  func.func @transform_3(%arg0: i32) -> (i32, i32) {
    %c0_i32 = arith.constant 0 : i32
    %c0_i32_0 = arith.constant 0 : i32
    return %c0_i32, %arg0 : i32, i32
  }
}

</mosaic_0001>

<llo_original>
// kernel: tpu_custom_call.1
$region0: #{tpu_custom_call.1}
  #allocation0 [shape = 'u32[]', space=smem, size = 0x4, offset = 0x4, fixed_abs, tag = 'smem constant byte address 0x4 - core index']
  #allocation1 [shape = 'u32[144,128]{1,0:T(1,128)}', space=vmem, size = 0x12000, scoped, tag = 'internal scratch']
  %s0 = inlined_call_operand.vmem [shape: f32[256,32], index: 0, kind: input, shape index: {}]
  %s1 = inlined_call_operand.vmem [shape: bf16[128,32], index: 1, kind: input, shape index: {}]
  %s2 = inlined_call_operand.hbm [shape: bf16[256,128], index: 2, kind: output, shape index: {0}]
  %s3 = inlined_call_operand.hbm [shape: bf16[128,256], index: 3, kind: output, shape index: {1}]
  %4 = xla_tuple %s2, %s3
  %s5 = sld [smem:[#allocation0]]
  $region49: #{tpu_custom_call.1} parent=0
    _
  %s7 = ssub.s32 1, %s5
  %s8 = scalar_select 0, %s7, %s5
  $region1: #{tpu_custom_call.1} parent=0
    #allocation2 [shape = 'u8[65536]{0}', space=vmem, size = 0x10000, scoped, tag = 'output window, operand 0']
    #allocation3 [shape = 's32[2]{0}', space=sflag, size = 0x8, scoped, tag = 'scoped memory for tpu_custom_call.1']
    #allocation4 [shape = 'u8[65536]{0}', space=vmem, size = 0x10000, scoped, tag = 'output window, operand 1']
    #allocation5 [shape = 's32[2]{0}', space=sflag, size = 0x8, scoped, tag = 'scoped memory for tpu_custom_call.1']
    %9 = vsyncpa [#allocation3], 0
    %s10 = scalar_lea.sflag [#allocation3], 1
    %11 = vsyncpa %s10, 0
    %12 = vsyncpa [#allocation5], 0
    %s13 = scalar_lea.sflag [#allocation5], 1
    %14 = vsyncpa %s13, 0
    loop: start=0, step=1, limit=4
    $region2: #{tpu_custom_call.1} parent=1 // loop_pre_header
      _
    $region3: #{tpu_custom_call.1} parent=1 // loop_header
      %s16 = sphi 0, %s20
      %p17 = scmp.ge.s32.totalorder %s16, 4
      %s26 = sphi 0, %s28
      %s29 = sphi 0, %s26
      %s30 = sphi 0, %s29
      %s46 = sphi 0, %s30
      %s50 = sphi 0, %s50
      %s52 = sphi 0, %s50
      %s53 = sphi 0, %s52
      %s67 = sphi 0, %s53
      %s73 = sphi 0, %s75
      %s76 = sphi 0, %s73
      %s77 = sphi 0, %s76
      %s93 = sphi 0, %s77
      %s99 = sphi 0, %s101
      %s102 = sphi 0, %s99
      %s103 = sphi 0, %s102
      %s119 = sphi 0, %s103
    $region4: #{tpu_custom_call.1} parent=1 // loop_header_branch
      %19 = sbr.rel (%p17) target = $region8
    $region5: #{tpu_custom_call.1} parent=1 // loop_body
      %s21 = ssub.s32 %s16, 1
      %s22 = ssub.s32 %s16, 2
      %s23 = sadd.s32 %s16, 1
      %s24 = ssub.s32 %s16, %s23
      %p25 = scmp.eq.s32.totalorder %s24, 0
      %s27 = sadd.s32 %s26, 1
      %s28 = scalar_select %p25, %s26, %s27
      %p31 = pneg %p25
      %p32 = scmp.eq.s32.totalorder %s16, 1
      %p33 = por %p31, %p32
      %p34 = scmp.ne.s32.totalorder %s26, %s29
      %p35 = scmp.eq.s32.totalorder %s16, 0
      %p36 = por %p34, %p35
      %p37 = scmp.ne.s32.totalorder %s26, %s29
      %p38 = scmp.eq.s32.totalorder %s21, 1
      %p39 = por %p37, %p38
      %p40 = scmp.ne.s32.totalorder %s29, %s30
      %p41 = scmp.eq.s32.totalorder %s21, 0
      %p42 = por %p40, %p41
      %p43 = scmp.ne.s32.totalorder %s29, %s30
      %p44 = scmp.eq.s32.totalorder %s22, 1
      %p45 = por %p43, %p44
      %p47 = scmp.ne.s32.totalorder %s30, %s46
      %p48 = scmp.eq.s32.totalorder %s22, 0
      %p49 = por %p47, %p48
      %s51 = sadd.s32 %s50, 1
      %p54 = scmp.eq.s32.totalorder %s16, 1
      %p55 = scmp.ne.s32.totalorder %s50, %s52
      %p56 = scmp.eq.s32.totalorder %s16, 0
      %p57 = por %p55, %p56
      %p58 = scmp.ne.s32.totalorder %s50, %s52
      %p59 = scmp.eq.s32.totalorder %s21, 1
      %p60 = por %p58, %p59
      %p61 = scmp.ne.s32.totalorder %s52, %s53
      %p62 = scmp.eq.s32.totalorder %s21, 0
      %p63 = por %p61, %p62
      %p64 = scmp.ne.s32.totalorder %s52, %s53
      %p65 = scmp.eq.s32.totalorder %s22, 1
      %p66 = por %p64, %p65
      %p68 = scmp.ne.s32.totalorder %s53, %s67
      %p69 = scmp.eq.s32.totalorder %s22, 0
      %p70 = por %p68, %p69
      %s71 = ssub.s32 %s16, %s23
      %p72 = scmp.eq.s32.totalorder %s71, 0
      %s74 = sadd.s32 %s73, 1
      %s75 = scalar_select %p72, %s73, %s74
      %p78 = pneg %p72
      %p79 = scmp.eq.s32.totalorder %s16, 1
      %p80 = por %p78, %p79
      %p81 = scmp.ne.s32.totalorder %s73, %s76
      %p82 = scmp.eq.s32.totalorder %s16, 0
      %p83 = por %p81, %p82
      %p84 = scmp.ne.s32.totalorder %s73, %s76
      %p85 = scmp.eq.s32.totalorder %s21, 1
      %p86 = por %p84, %p85
      %p87 = scmp.ne.s32.totalorder %s76, %s77
      %p88 = scmp.eq.s32.totalorder %s21, 0
      %p89 = por %p87, %p88
      %p90 = scmp.ne.s32.totalorder %s76, %s77
      %p91 = scmp.eq.s32.totalorder %s22, 1
      %p92 = por %p90, %p91
      %p94 = scmp.ne.s32.totalorder %s77, %s93
      %p95 = scmp.eq.s32.totalorder %s22, 0
      %p96 = por %p94, %p95
      %s97 = ssub.s32 %s16, %s23
      %p98 = scmp.eq.s32.totalorder %s97, 0
      %s100 = sadd.s32 %s99, 1
      %s101 = scalar_select %p98, %s99, %s100
      %p104 = pneg %p98
      %p105 = scmp.eq.s32.totalorder %s16, 1
      %p106 = por %p104, %p105
      %p107 = scmp.ne.s32.totalorder %s99, %s102
      %p108 = scmp.eq.s32.totalorder %s16, 0
      %p109 = por %p107, %p108
      %p110 = scmp.ne.s32.totalorder %s99, %s102
      %p111 = scmp.eq.s32.totalorder %s21, 1
      %p112 = por %p110, %p111
      %p113 = scmp.ne.s32.totalorder %s102, %s103
      %p114 = scmp.eq.s32.totalorder %s21, 0
      %p115 = por %p113, %p114
      %p116 = scmp.ne.s32.totalorder %s102, %s103
      %p117 = scmp.eq.s32.totalorder %s22, 1
      %p118 = por %p116, %p117
      %p120 = scmp.ne.s32.totalorder %s103, %s119
      %p121 = scmp.eq.s32.totalorder %s22, 0
      %p122 = por %p120, %p121
      %p123 = scmp.le.s32.totalorder 1, %s16
      %p124 = scmp.lt.s32.totalorder %s16, 3
      %p125 = pnand %p123, %p124
      %p126 = pneg %p125
      // Predicated region
      $region9: #{tpu_custom_call.1} parent=5 // pred_check
        _
      $region10: #{tpu_custom_call.1} parent=5 // pred_check_branch
        %128 = sbr.rel (%p125) target = $region12
      $region11: #{tpu_custom_call.1} parent=5 // pred_region
        %s129 = ssub.s32 %s16, 1
        // Predicated region
        $region13: #{tpu_custom_call.1} parent=11 // pred_check
          %p130 = pneg %p63
        $region14: #{tpu_custom_call.1} parent=11 // pred_check_branch
          %132 = sbr.rel (%p130) target = $region16
        $region15: #{tpu_custom_call.1} parent=11 // pred_region
          _
        $region16: #{tpu_custom_call.1} parent=11 // pred_fallthru
          _
      $region12: #{tpu_custom_call.1} parent=5 // pred_fallthru
        _
      %p133 = scmp.lt.s32.totalorder %s16, 2
      // Predicated region
      $region17: #{tpu_custom_call.1} parent=5 // pred_check
        %p134 = pneg %p133
      $region18: #{tpu_custom_call.1} parent=5 // pred_check_branch
        %136 = sbr.rel (%p134) target = $region20
      $region19: #{tpu_custom_call.1} parent=5 // pred_region
        // Predicated region
        $region21: #{tpu_custom_call.1} parent=19 // pred_check
          %p137 = pneg %p36
        $region22: #{tpu_custom_call.1} parent=19 // pred_check_branch
          %139 = sbr.rel (%p137) target = $region24
        $region23: #{tpu_custom_call.1} parent=19 // pred_region
          %s140 = smul.u32 16, %s16
          %p141 = scmp.lt.s32.totalorder %s140, 31
          %s142 = scalar_select %p141, %s140, 31
          %s143 = smul.addr %s142, 8
          %s144 = scalar_lea.vmem %s0, %s143
          %s145 = smul.u32 16, %s16
        $region24: #{tpu_custom_call.1} parent=19 // pred_fallthru
          _
      $region20: #{tpu_custom_call.1} parent=5 // pred_fallthru
        _
      %p146 = scmp.le.s32.totalorder 1, %s16
      %p147 = scmp.lt.s32.totalorder %s16, 3
      %p148 = pnand %p146, %p147
      %p149 = pneg %p148
      // Predicated region
      $region25: #{tpu_custom_call.1} parent=5 // pred_check
        _
      $region26: #{tpu_custom_call.1} parent=5 // pred_check_branch
        %151 = sbr.rel (%p148) target = $region28
      $region27: #{tpu_custom_call.1} parent=5 // pred_region
        %s152 = ssub.s32 %s16, 1
        %s153 = smul.u32 16, %s21
        %p154 = scmp.lt.s32.totalorder %s153, 31
        %s155 = scalar_select %p154, %s153, 31
        %s156 = smul.addr %s155, 8
        %s157 = scalar_lea.vmem %s0, %s156
        %p158 = pneg %p42
        %p159 = pneg %p39
        %p160 = pneg %p63
        %p161 = pneg %p60
        %p162 = pneg %p89
        %p163 = pneg %p86
        %s164 = sand.u32 %s76, 1
        %s165 = scalar_lea.sflag [#allocation3], %s164
        %s166 = sand.u32 %s76, 1
        %s167 = smul.addr %s166, 64
        %s168 = scalar_lea.vmem [#allocation2], %s167
        %p169 = pneg %p115
        %p170 = pneg %p112
        %s171 = sand.u32 %s102, 1
        %s172 = scalar_lea.sflag [#allocation5], %s171
        %s173 = sand.u32 %s102, 1
        %s174 = smul.addr %s173, 64
        %s175 = scalar_lea.vmem [#allocation4], %s174
        %s176 = smul.u32 16, %s21
        %p177 = scmp.lt.s32.totalorder %s176, 31
        %s178 = scalar_select %p177, %s176, 31
        %s179 = smul.addr %s178, 8
        %s180 = scalar_lea.vmem %s0, %s179
        %s181 = smul.u32 16, %s21
        %s182 = smul.u32 16, %s21
        %v184 = vld [vmem:[%s180] sm:$0xff]
        %v185 = vld [vmem:[%s180 + $0x8] sm:$0xff]
        %v186 = vld [vmem:[%s180 + $0x10] sm:$0xff]
        %v187 = vld [vmem:[%s180 + $0x18] sm:$0xff]
        %v188 = vld [vmem:[%s180 + $0x20] sm:$0xff]
        %v189 = vld [vmem:[%s180 + $0x28] sm:$0xff]
        %v190 = vld [vmem:[%s180 + $0x30] sm:$0xff]
        %v191 = vld [vmem:[%s180 + $0x38] sm:$0xff]
        %v192 = vld [vmem:[%s180 + $0x40] sm:$0xff]
        %v193 = vld [vmem:[%s180 + $0x48] sm:$0xff]
        %v194 = vld [vmem:[%s180 + $0x50] sm:$0xff]
        %v195 = vld [vmem:[%s180 + $0x58] sm:$0xff]
        %v196 = vld [vmem:[%s180 + $0x60] sm:$0xff]
        %v197 = vld [vmem:[%s180 + $0x68] sm:$0xff]
        %v198 = vld [vmem:[%s180 + $0x70] sm:$0xff]
        %v199 = vld [vmem:[%s180 + $0x78] sm:$0xff]
        %v200 = vpack.c.bf16 %v185, %v184
        %v201 = vpack.c.bf16 %v187, %v186
        %v202 = vpack.c.bf16 %v189, %v188
        %v203 = vpack.c.bf16 %v191, %v190
        %v204 = vpack.c.bf16 %v193, %v192
        %v205 = vpack.c.bf16 %v195, %v194
        %v206 = vpack.c.bf16 %v197, %v196
        %v207 = vpack.c.bf16 %v199, %v198
        %v208 = vld [vmem:[%s1] sm:$0xf]
        %v209 = vld [vmem:[%s1 + $0x4] sm:$0xf]
        %v210 = vld [vmem:[%s1 + $0x8] sm:$0xf]
        %v211 = vld [vmem:[%s1 + $0xc] sm:$0xf]
        %v212 = vld [vmem:[%s1 + $0x10] sm:$0xf]
        %v213 = vld [vmem:[%s1 + $0x14] sm:$0xf]
        %v214 = vld [vmem:[%s1 + $0x18] sm:$0xf]
        %v215 = vld [vmem:[%s1 + $0x1c] sm:$0xf]
        %v216 = vld [vmem:[%s1 + $0x20] sm:$0xf]
        %v217 = vld [vmem:[%s1 + $0x24] sm:$0xf]
        %v218 = vld [vmem:[%s1 + $0x28] sm:$0xf]
        %v219 = vld [vmem:[%s1 + $0x2c] sm:$0xf]
        %v220 = vld [vmem:[%s1 + $0x30] sm:$0xf]
        %v221 = vld [vmem:[%s1 + $0x34] sm:$0xf]
        %v222 = vld [vmem:[%s1 + $0x38] sm:$0xf]
        %v223 = vld [vmem:[%s1 + $0x3c] sm:$0xf]
        %v240 = vunpack.c.l.b16 %v208
        %v241 = vunpack.c.l.b16 %v209
        %v242 = vunpack.c.l.b16 %v210
        %v243 = vunpack.c.l.b16 %v211
        %v244 = vunpack.c.l.b16 %v212
        %v245 = vunpack.c.l.b16 %v213
        %v246 = vunpack.c.l.b16 %v214
        %v247 = vunpack.c.l.b16 %v215
        %v248 = vunpack.c.l.b16 %v216
        %v249 = vunpack.c.l.b16 %v217
        %v250 = vunpack.c.l.b16 %v218
        %v251 = vunpack.c.l.b16 %v219
        %v252 = vunpack.c.l.b16 %v220
        %v253 = vunpack.c.l.b16 %v221
        %v254 = vunpack.c.l.b16 %v222
        %v255 = vunpack.c.l.b16 %v223
        %v256 = vpack.c.b16 %v241, %v240
        %v257 = vpack.c.b16 %v243, %v242
        %v258 = vpack.c.b16 %v245, %v244
        %v259 = vpack.c.b16 %v247, %v246
        %v260 = vpack.c.b16 %v249, %v248
        %v261 = vpack.c.b16 %v251, %v250
        %v262 = vpack.c.b16 %v253, %v252
        %v263 = vpack.c.b16 %v255, %v254
        %vm264 = vcmask 261120
        %v266 = vsel %vm264, %v200, 0
        %v269 = vsel %vm264, %v201, 0
        %v272 = vsel %vm264, %v202, 0
        %v275 = vsel %vm264, %v203, 0
        %v278 = vsel %vm264, %v204, 0
        %v281 = vsel %vm264, %v205, 0
        %v284 = vsel %vm264, %v206, 0
        %v287 = vsel %vm264, %v207, 0
        %v290 = vsel %vm264, %v256, 0
        %v293 = vsel %vm264, %v257, 0
        %v296 = vsel %vm264, %v258, 0
        %v299 = vsel %vm264, %v259, 0
        %v302 = vsel %vm264, %v260, 0
        %v305 = vsel %vm264, %v261, 0
        %v308 = vsel %vm264, %v262, 0
        %v311 = vsel %vm264, %v263, 0
        %313 = vmatprep.subr.bf16.mxu0 0
        %314 = vmatpush1.bf16.xpose.msra.mxu0 %v290
        %315 = vmatprep.subr.bf16.mxu0 0
        %316 = vmatpush1.bf16.xpose.msra.mxu0 %v293
        %317 = vmatprep.subr.bf16.mxu0 0
        %318 = vmatpush1.bf16.xpose.msra.mxu0 %v296
        %319 = vmatprep.subr.bf16.mxu0 0
        %320 = vmatpush1.bf16.xpose.msra.mxu0 %v299
        %321 = vmatprep.subr.bf16.mxu0 0
        %322 = vmatpush1.bf16.xpose.msra.mxu0 %v302
        %323 = vmatprep.subr.bf16.mxu0 0
        %324 = vmatpush1.bf16.xpose.msra.mxu0 %v305
        %325 = vmatprep.subr.bf16.mxu0 0
        %326 = vmatpush1.bf16.xpose.msra.mxu0 %v308
        %327 = vmatprep.subr.bf16.mxu0 0
        %328 = vmatpush1.bf16.xpose.msra.mxu0 %v311
        %329 = vmatprep.subr.bf16.mxu0 0
        %330 = vmatpush1.bf16.xpose.msra.mxu0 0
        %331 = vmatprep.subr.bf16.mxu0 0
        %332 = vmatpush1.bf16.xpose.msra.mxu0 0
        %333 = vmatprep.subr.bf16.mxu0 0
        %334 = vmatpush1.bf16.xpose.msra.mxu0 0
        %335 = vmatprep.subr.bf16.mxu0 0
        %336 = vmatpush1.bf16.xpose.msra.mxu0 0
        %337 = vmatprep.subr.bf16.mxu0 0
        %338 = vmatpush1.bf16.xpose.msra.mxu0 0
        %339 = vmatprep.subr.bf16.mxu0 0
        %340 = vmatpush1.bf16.xpose.msra.mxu0 0
        %341 = vmatprep.subr.bf16.mxu0 0
        %342 = vmatpush1.bf16.xpose.msra.mxu0 0
        %343 = vmatprep.subr.bf16.mxu0 0
        %344 = vmatpush1.bf16.xpose.msra.mxu0 0
        %345 = vmatprep.mubr.bf16.mxu0 0
        %346 = vmatmul.mubr.bf16.gmra.mrb[0].mxu0 %v266
        %v347 = vpop.f32.mrb[0].mxu0
        %v348 = vadd.f32 0.0, %v347
        %v349 = vpop.f32.mrb[0].mxu0
        %v350 = vpop.f32.mrb[0].mxu0
        %v351 = vadd.f32 0.0, %v350
        %v352 = vpop.f32.mrb[0].mxu0
        %353 = vmatprep.mubr.bf16.mxu0 0
        %354 = vmatmul.mubr.bf16.gmra.mrb[0].mxu0 %v269
        %v355 = vpop.f32.mrb[0].mxu0
        %v356 = vadd.f32 0.0, %v355
        %v357 = vpop.f32.mrb[0].mxu0
        %v358 = vpop.f32.mrb[0].mxu0
        %v359 = vadd.f32 0.0, %v358
        %v360 = vpop.f32.mrb[0].mxu0
        %361 = vmatprep.mubr.bf16.mxu0 0
        %362 = vmatmul.mubr.bf16.gmra.mrb[0].mxu0 %v272
        %v363 = vpop.f32.mrb[0].mxu0
        %v364 = vadd.f32 0.0, %v363
        %v365 = vpop.f32.mrb[0].mxu0
        %v366 = vpop.f32.mrb[0].mxu0
        %v367 = vadd.f32 0.0, %v366
        %v368 = vpop.f32.mrb[0].mxu0
        %369 = vmatprep.mubr.bf16.mxu0 0
        %370 = vmatmul.mubr.bf16.gmra.mrb[0].mxu0 %v275
        %v371 = vpop.f32.mrb[0].mxu0
        %v372 = vadd.f32 0.0, %v371
        %v373 = vpop.f32.mrb[0].mxu0
        %v374 = vpop.f32.mrb[0].mxu0
        %v375 = vadd.f32 0.0, %v374
        %v376 = vpop.f32.mrb[0].mxu0
        %377 = vmatprep.mubr.bf16.mxu0 0
        %378 = vmatmul.mubr.bf16.gmra.mrb[0].mxu0 %v278
        %v379 = vpop.f32.mrb[0].mxu0
        %v380 = vadd.f32 0.0, %v379
        %v381 = vpop.f32.mrb[0].mxu0
        %v382 = vpop.f32.mrb[0].mxu0
        %v383 = vadd.f32 0.0, %v382
        %v384 = vpop.f32.mrb[0].mxu0
        %385 = vmatprep.mubr.bf16.mxu0 0
        %386 = vmatmul.mubr.bf16.gmra.mrb[0].mxu0 %v281
        %v387 = vpop.f32.mrb[0].mxu0
        %v388 = vadd.f32 0.0, %v387
        %v389 = vpop.f32.mrb[0].mxu0
        %v390 = vpop.f32.mrb[0].mxu0
        %v391 = vadd.f32 0.0, %v390
        %v392 = vpop.f32.mrb[0].mxu0
        %393 = vmatprep.mubr.bf16.mxu0 0
        %394 = vmatmul.mubr.bf16.gmra.mrb[0].mxu0 %v284
        %v395 = vpop.f32.mrb[0].mxu0
        %v396 = vadd.f32 0.0, %v395
        %v397 = vpop.f32.mrb[0].mxu0
        %v398 = vpop.f32.mrb[0].mxu0
        %v399 = vadd.f32 0.0, %v398
        %v400 = vpop.f32.mrb[0].mxu0
        %401 = vmatprep.mubr.bf16.mxu0 0
        %402 = vmatmul.mubr.bf16.gmra.mrb[0].mxu0 %v287
        %v403 = vpop.f32.mrb[0].mxu0
        %v404 = vadd.f32 0.0, %v403
        %v405 = vpop.f32.mrb[0].mxu0
        %v406 = vpop.f32.mrb[0].mxu0
        %v407 = vadd.f32 0.0, %v406
        %v408 = vpop.f32.mrb[0].mxu0
        %409 = vdwg.mxu0
        %v410 = vpack.c.bf16 %v351, %v348
        %v411 = vpack.c.bf16 %v359, %v356
        %v412 = vpack.c.bf16 %v367, %v364
        %v413 = vpack.c.bf16 %v375, %v372
        %v414 = vpack.c.bf16 %v383, %v380
        %v415 = vpack.c.bf16 %v391, %v388
        %v416 = vpack.c.bf16 %v399, %v396
        %v417 = vpack.c.bf16 %v407, %v404
        %v426 = vunpack.c.l.b16 %v410
        %v427 = vunpack.c.h.b16 %v410
        %v428 = vunpack.c.l.b16 %v411
        %v429 = vunpack.c.h.b16 %v411
        %v430 = vunpack.c.l.b16 %v412
        %v431 = vunpack.c.h.b16 %v412
        %v432 = vunpack.c.l.b16 %v413
        %v433 = vunpack.c.h.b16 %v413
        %v434 = vunpack.c.l.b16 %v414
        %v435 = vunpack.c.h.b16 %v414
        %v436 = vunpack.c.l.b16 %v415
        %v437 = vunpack.c.h.b16 %v415
        %v438 = vunpack.c.l.b16 %v416
        %v439 = vunpack.c.h.b16 %v416
        %v440 = vunpack.c.l.b16 %v417
        %v441 = vunpack.c.h.b16 %v417
        %v442 = vpack.c.b16 %v426, %v426
        %v443 = vpack.c.b16 %v427, %v427
        %v444 = vpack.c.b16 %v428, %v428
        %v445 = vpack.c.b16 %v429, %v429
        %v446 = vpack.c.b16 %v430, %v430
        %v447 = vpack.c.b16 %v431, %v431
        %v448 = vpack.c.b16 %v432, %v432
        %v449 = vpack.c.b16 %v433, %v433
        %v450 = vpack.c.b16 %v434, %v434
        %v451 = vpack.c.b16 %v435, %v435
        %v452 = vpack.c.b16 %v436, %v436
        %v453 = vpack.c.b16 %v437, %v437
        %v454 = vpack.c.b16 %v438, %v438
        %v455 = vpack.c.b16 %v439, %v439
        %v456 = vpack.c.b16 %v440, %v440
        %v457 = vpack.c.b16 %v441, %v441
        %474 = vst [vmem:[%s168] sm:$0xf] %v442
        %475 = vst [vmem:[%s168 + $0x4] sm:$0xf] %v443
        %476 = vst [vmem:[%s168 + $0x8] sm:$0xf] %v444
        %477 = vst [vmem:[%s168 + $0xc] sm:$0xf] %v445
        %478 = vst [vmem:[%s168 + $0x10] sm:$0xf] %v446
        %479 = vst [vmem:[%s168 + $0x14] sm:$0xf] %v447
        %480 = vst [vmem:[%s168 + $0x18] sm:$0xf] %v448
        %481 = vst [vmem:[%s168 + $0x1c] sm:$0xf] %v449
        %482 = vst [vmem:[%s168 + $0x20] sm:$0xf] %v450
        %483 = vst [vmem:[%s168 + $0x24] sm:$0xf] %v451
        %484 = vst [vmem:[%s168 + $0x28] sm:$0xf] %v452
        %485 = vst [vmem:[%s168 + $0x2c] sm:$0xf] %v453
        %486 = vst [vmem:[%s168 + $0x30] sm:$0xf] %v454
        %487 = vst [vmem:[%s168 + $0x34] sm:$0xf] %v455
        %488 = vst [vmem:[%s168 + $0x38] sm:$0xf] %v456
        %489 = vst [vmem:[%s168 + $0x3c] sm:$0xf] %v457
        %490 = vxpose.xlu0.c.b16.start [1/8] %v410, 128
        %491 = vxpose.xlu0.c.b16.cont [2/8] %v411, 128
        %492 = vxpose.xlu0.c.b16.cont [3/8] %v412, 128
        %493 = vxpose.xlu0.c.b16.cont [4/8] %v413, 128
        %494 = vxpose.xlu0.c.b16.cont [5/8] %v414, 128
        %495 = vxpose.xlu0.c.b16.cont [6/8] %v415, 128
        %496 = vxpose.xlu0.c.b16.cont [7/8] %v416, 128
        %497 = vxpose.xlu0.c.b16.end [8/8] %v417, 128
        %v498 = vpop.trf.xlu0
        %v499 = vpop.trf.xlu0
        %v500 = vpop.trf.xlu0
        %v501 = vpop.trf.xlu0
        %v502 = vpop.trf.xlu0
        %v503 = vpop.trf.xlu0
        %v504 = vpop.trf.xlu0
        %v505 = vpop.trf.xlu0
        %v514 = vunpack.c.l.b16 %v498
        %v515 = vunpack.c.h.b16 %v498
        %v516 = vunpack.c.l.b16 %v499
        %v517 = vunpack.c.h.b16 %v499
        %v518 = vunpack.c.l.b16 %v500
        %v519 = vunpack.c.h.b16 %v500
        %v520 = vunpack.c.l.b16 %v501
        %v521 = vunpack.c.h.b16 %v501
        %v522 = vunpack.c.l.b16 %v502
        %v523 = vunpack.c.h.b16 %v502
        %v524 = vunpack.c.l.b16 %v503
        %v525 = vunpack.c.h.b16 %v503
        %v526 = vunpack.c.l.b16 %v504
        %v527 = vunpack.c.h.b16 %v504
        %v528 = vunpack.c.l.b16 %v505
        %v529 = vunpack.c.h.b16 %v505
        %v530 = vpack.c.b16 %v514, %v514
        %v531 = vpack.c.b16 %v515, %v515
        %v532 = vpack.c.b16 %v516, %v516
        %v533 = vpack.c.b16 %v517, %v517
        %v534 = vpack.c.b16 %v518, %v518
        %v535 = vpack.c.b16 %v519, %v519
        %v536 = vpack.c.b16 %v520, %v520
        %v537 = vpack.c.b16 %v521, %v521
        %v538 = vpack.c.b16 %v522, %v522
        %v539 = vpack.c.b16 %v523, %v523
        %v540 = vpack.c.b16 %v524, %v524
        %v541 = vpack.c.b16 %v525, %v525
        %v542 = vpack.c.b16 %v526, %v526
        %v543 = vpack.c.b16 %v527, %v527
        %v544 = vpack.c.b16 %v528, %v528
        %v545 = vpack.c.b16 %v529, %v529
        %562 = vst [vmem:[%s175] sm:$0xf] %v530
        %563 = vst [vmem:[%s175 + $0x4] sm:$0xf] %v531
        %564 = vst [vmem:[%s175 + $0x8] sm:$0xf] %v532
        %565 = vst [vmem:[%s175 + $0xc] sm:$0xf] %v533
        %566 = vst [vmem:[%s175 + $0x10] sm:$0xf] %v534
        %567 = vst [vmem:[%s175 + $0x14] sm:$0xf] %v535
        %568 = vst [vmem:[%s175 + $0x18] sm:$0xf] %v536
        %569 = vst [vmem:[%s175 + $0x1c] sm:$0xf] %v537
        %570 = vst [vmem:[%s175 + $0x20] sm:$0xf] %v538
        %571 = vst [vmem:[%s175 + $0x24] sm:$0xf] %v539
        %572 = vst [vmem:[%s175 + $0x28] sm:$0xf] %v540
        %573 = vst [vmem:[%s175 + $0x2c] sm:$0xf] %v541
        %574 = vst [vmem:[%s175 + $0x30] sm:$0xf] %v542
        %575 = vst [vmem:[%s175 + $0x34] sm:$0xf] %v543
        %576 = vst [vmem:[%s175 + $0x38] sm:$0xf] %v544
        %577 = vst [vmem:[%s175 + $0x3c] sm:$0xf] %v545
        %s578 = sand.u32 %s76, 1
        %s579 = scalar_lea.sflag [#allocation3], %s578
        %s580 = sand.u32 %s76, 1
        %s581 = smul.addr %s580, 64
        %s582 = scalar_lea.vmem [#allocation2], %s581
        %s583 = sand.u32 %s102, 1
        %s584 = scalar_lea.sflag [#allocation5], %s583
        %s585 = sand.u32 %s102, 1
        %s586 = smul.addr %s585, 64
        %s587 = scalar_lea.vmem [#allocation4], %s586
        // Predicated region
        $region29: #{tpu_custom_call.1} parent=27 // pred_check
          %p588 = pneg %p86
        $region30: #{tpu_custom_call.1} parent=27 // pred_check_branch
          %590 = sbr.rel (%p588) target = $region32
        $region31: #{tpu_custom_call.1} parent=27 // pred_region
          %s591 = smul.u32 16, %s21
          %s593 = ssub.s32 1024, 1024
          %594 = vsyncadd %s579, %s593
          %s595 = smul.addr %s591, 64
          %s596 = scalar_lea.hbm %s2, %s595
          %s597 = sshll.u32 %s582, 4
          %s598 = int_to_ptr.vmem [resolvable:$true] %s597
          %603 = dma.vmem_to_hbm [thread:$0]  %s598, 1024, %s596, %s579, 64, 64, 4
        $region32: #{tpu_custom_call.1} parent=27 // pred_fallthru
          _
        // Predicated region
        $region33: #{tpu_custom_call.1} parent=27 // pred_check
          %p604 = pneg %p112
        $region34: #{tpu_custom_call.1} parent=27 // pred_check_branch
          %606 = sbr.rel (%p604) target = $region36
        $region35: #{tpu_custom_call.1} parent=27 // pred_region
          %s608 = ssub.s32 1024, 1024
          %609 = vsyncadd %s584, %s608
          %s610 = smul.addr %s21, 64
          %s611 = scalar_lea.hbm %s3, %s610
          %s612 = sshll.u32 %s587, 4
          %s613 = int_to_ptr.vmem [resolvable:$true] %s612
          %618 = dma.vmem_to_hbm [thread:$0]  %s613, 1024, %s611, %s584, 64, 128, 4
        $region36: #{tpu_custom_call.1} parent=27 // pred_fallthru
          _
      $region28: #{tpu_custom_call.1} parent=5 // pred_fallthru
        _
      %p619 = scmp.le.s32.totalorder 2, %s16
      // Predicated region
      $region37: #{tpu_custom_call.1} parent=5 // pred_check
        %p620 = pneg %p619
      $region38: #{tpu_custom_call.1} parent=5 // pred_check_branch
        %622 = sbr.rel (%p620) target = $region40
      $region39: #{tpu_custom_call.1} parent=5 // pred_region
        %s623 = ssub.s32 %s16, 2
        // Predicated region
        $region41: #{tpu_custom_call.1} parent=39 // pred_check
          %p624 = pneg %p92
        $region42: #{tpu_custom_call.1} parent=39 // pred_check_branch
          %626 = sbr.rel (%p624) target = $region44
        $region43: #{tpu_custom_call.1} parent=39 // pred_region
          %s627 = sand.u32 %s77, 1
          %s628 = scalar_lea.sflag [#allocation3], %s627
          %s629 = sand.u32 %s77, 1
          %s630 = smul.addr %s629, 64
          %s631 = scalar_lea.vmem [#allocation2], %s630
          %632 = dma.done %s628, 1024
        $region44: #{tpu_custom_call.1} parent=39 // pred_fallthru
          _
        // Predicated region
        $region45: #{tpu_custom_call.1} parent=39 // pred_check
          %p633 = pneg %p118
        $region46: #{tpu_custom_call.1} parent=39 // pred_check_branch
          %635 = sbr.rel (%p633) target = $region48
        $region47: #{tpu_custom_call.1} parent=39 // pred_region
          %s636 = sand.u32 %s103, 1
          %s637 = scalar_lea.sflag [#allocation5], %s636
          %s638 = sand.u32 %s103, 1
          %s639 = smul.addr %s638, 64
          %s640 = scalar_lea.vmem [#allocation4], %s639
          %641 = dma.done %s637, 1024
        $region48: #{tpu_custom_call.1} parent=39 // pred_fallthru
          _
      $region40: #{tpu_custom_call.1} parent=5 // pred_fallthru
        _
    $region6: #{tpu_custom_call.1} parent=1 // loop_footer
      %s20 = sadd.s32 1, %s16
    $region7: #{tpu_custom_call.1} parent=1 // loop_footer_branch
      %15 = sbr.rel target = $region3
    $region8: #{tpu_custom_call.1} parent=1 // loop_exit
      _
    %642 = vsyncpa [#allocation3], 1
    %s643 = scalar_lea.sflag [#allocation3], 1
    %644 = vsyncpa %s643, 1
    %645 = vsyncpa [#allocation5], 1
    %s646 = scalar_lea.sflag [#allocation5], 1
    %647 = vsyncpa %s646, 1

</llo_original>
